<compile_context>
chip_gen: v6e
topology: v6e:2x2x1
jax: 0.10.0
libtpu: 0.0.40
codegen_flags: <defaults>
</compile_context>

<pallas_src>
import functools

import jax
import jax.numpy as jnp
from jax.experimental import pallas as pl
from jax.experimental.pallas import tpu as pltpu


_LANE = 128
_ROW_ALIGN = 16          # multiple of 8 (f32 sublane) and 16 (bf16 sublane packing)
_MAX_BATCH_TILE = 2048   # per-tile batch cap (fits VMEM with large headroom)
_MIN_SPLIT_BATCH = 512   # from this batch size on, use >=2 grid steps (v7x dual-TC)


def _round_up(n, m):
    return ((n + m - 1) // m) * m


def _cdiv(a, b):
    return -(-a // b)


def _out_dtype():
    """bf16 output on chips with bf16 VPU/EUP (v6e/v7x); f32 elsewhere (e.g. v5e)."""
    try:
        kind = jax.devices()[0].device_kind.lower()
    except Exception:
        return jnp.float32
    if any(tag in kind for tag in ("v6", "v7", "7x")):
        return jnp.bfloat16
    return jnp.float32


def actor_kernel(x_ref, w1_ref, b1_ref, w2_ref, b2_ref, w3_ref, b3_ref, o_ref):
    # Fused 3-layer MLP: relu(x@W1+b1) -> relu(.@W2+b2) -> tanh(.@W3+b3)
    # MXU operands in bf16, accumulation + bias/ReLU/tanh in f32; store in o_ref.dtype.
    x = x_ref[...].astype(jnp.bfloat16)  # in-kernel cast: hides under DMA/MXU
    h1 = jnp.dot(x, w1_ref[...], preferred_element_type=jnp.float32) + b1_ref[...]
    h1 = jnp.maximum(h1, 0.0)
    h2 = (
        jnp.dot(h1.astype(jnp.bfloat16), w2_ref[...], preferred_element_type=jnp.float32)
        + b2_ref[...]
    )
    h2 = jnp.maximum(h2, 0.0)
    mu = (
        jnp.dot(h2.astype(jnp.bfloat16), w3_ref[...], preferred_element_type=jnp.float32)
        + b3_ref[...]
    )
    o_ref[...] = jnp.tanh(mu).astype(o_ref.dtype)


def prepare_actor_params(params):
    """One-time padding / dtype conversion of the Actor parameters.

    Weights are stored as (in_features, out_features) so the kernel computes
    x @ W + b (equivalent to PyTorch's x @ W.T + b). Output feature dims are
    zero-padded to lane multiples (128); the first layer's K dim (input_shape)
    is left unpadded and handled with a full-extent block. Zero padding is
    semantics-preserving (relu(0)=0, tanh(0)=0, zero rows/cols add nothing).
    Returns (padded_params, output_shape).
    """
    w1, b1 = params["w1"], params["b1"]
    w2, b2 = params["w2"], params["b2"]
    w3, b3 = params["w3"], params["b3"]

    d_in, h1 = w1.shape
    h2 = w2.shape[1]
    d_out = w3.shape[1]
    h1p = _round_up(h1, _LANE)
    h2p = _round_up(h2, _LANE)
    d_out_p = _round_up(d_out, _LANE)

    def pad_w(w, rows, cols):
        full = jnp.zeros((rows, cols), jnp.float32).at[: w.shape[0], : w.shape[1]].set(w)
        return full.astype(jnp.bfloat16)  # bf16 weights: half the DMA bytes

    def pad_b(b, cols):
        return jnp.zeros((1, cols), jnp.float32).at[0, : b.shape[0]].set(b)

    padded = {
        "w1": pad_w(w1, d_in, h1p),
        "b1": pad_b(b1, h1p),
        "w2": pad_w(w2, h1p, h2p),
        "b2": pad_b(b2, h2p),
        "w3": pad_w(w3, h2p, d_out_p),
        "b3": pad_b(b3, d_out_p),
    }
    padded = jax.tree_util.tree_map(jnp.asarray, padded)
    return padded, int(d_out)


def _choose_batch_tiling(B):
    """Balanced batch tiling: (num_tiles, tile_rows)."""
    if B < _MIN_SPLIT_BATCH:
        n = 1
    else:
        # >=2 steps so both v7x TensorCores get work; balanced sizes for ragged B.
        n = max(2, _cdiv(B, _MAX_BATCH_TILE))
    tb = _round_up(_cdiv(B, n), _ROW_ALIGN)
    return n, tb


def _forward_padded(x, padded_params):
    """Runs the fused kernel; returns the padded (bp, 128) output buffer."""
    w1, b1 = padded_params["w1"], padded_params["b1"]
    w2, b2 = padded_params["w2"], padded_params["b2"]
    w3, b3 = padded_params["w3"], padded_params["b3"]

    B, d_in = x.shape
    d_out_p = w3.shape[1]
    out_dtype = _out_dtype()

    n_tiles, tb = _choose_batch_tiling(B)
    bp = n_tiles * tb

    xp = x.astype(jnp.float32)
    if bp != B:
        # Balanced tiles keep the dead rows to < n_tiles * 16; skipped entirely
        # whenever the batch already matches the tiling.
        xp = jnp.pad(xp, ((0, bp - B), (0, 0)))

    const = lambda shape: pl.BlockSpec(shape, lambda i: (0, 0))

    return pl.pallas_call(
        actor_kernel,
        out_shape=jax.ShapeDtypeStruct((bp, d_out_p), out_dtype),
        grid=(n_tiles,),
        in_specs=[
            pl.BlockSpec((tb, d_in), lambda i: (i, 0)),  # x: batch-tiled, K un-padded
            const(w1.shape),  # weights/biases: constant index_map -> VMEM-resident
            const(b1.shape),
            const(w2.shape),
            const(b2.shape),
            const(w3.shape),
            const(b3.shape),
        ],
        out_specs=pl.BlockSpec((tb, d_out_p), lambda i: (i, 0)),
        compiler_params=pltpu.CompilerParams(
            dimension_semantics=("parallel",),
            # Covers tb up to 2048: double-buffered x/out tiles, f32 h1/h2
            # intermediates, resident bf16 weights. Well inside v7x's 64 MiB.
            vmem_limit_bytes=16 << 20,
        ),
    )(xp, w1, b1, w2, b2, w3, b3)


# Preferred entry point for large-batch consumers: no post-kernel slice (no extra
# HBM pass); valid actions live in out[:B, :d_out].
actor_forward_padded = jax.jit(_forward_padded)


@functools.partial(jax.jit, static_argnames=("d_out",))
def actor_forward(x, padded_params, d_out):
    """API-compat wrapper returning (B, d_out) actions (slices the padded buffer)."""
    out_p = _forward_padded(x, padded_params)
    return out_p[: x.shape[0], :d_out]


def init_actor_params(key, input_shape, output_shape):
    """Deterministic init mimicking torch.nn.Linear (U[-1/sqrt(fan_in), +])."""
    dims = [(input_shape, 120), (120, 84), (84, output_shape)]
    names = ["1", "2", "3"]
    params = {}
    for name, (fan_in, fan_out) in zip(names, dims):
        key, kw, kb = jax.random.split(key, 3)
        bound = 1.0 / jnp.sqrt(jnp.float32(fan_in))
        params["w" + name] = jax.random.uniform(
            kw, (fan_in, fan_out), jnp.float32, -bound, bound
        )
        params["b" + name] = jax.random.uniform(
            kb, (fan_out,), jnp.float32, -bound, bound
        )
    return params


if __name__ == "__main__":
    # Small shapes consistent with the module: obs dim 16, action dim 4.
    batch = 2
    input_shape = 16
    output_shape = 4

    key = jax.random.PRNGKey(0)
    k_params, k_x = jax.random.split(key)
    params = init_actor_params(k_params, input_shape, output_shape)
    padded_params, d_out = prepare_actor_params(params)  # one-time padding
    x = jax.random.normal(k_x, (batch, input_shape), jnp.float32)

    out = actor_forward(x, padded_params, d_out)
    out = jax.block_until_ready(out)

    # Reference check in plain f32 JAX. Kernel uses bf16 MXU operands (and bf16
    # output on v6e/v7x), so allow ~3e-2 tolerance instead of 1e-5.
    h1 = jnp.maximum(x @ params["w1"] + params["b1"], 0.0)
    h2 = jnp.maximum(h1 @ params["w2"] + params["b2"], 0.0)
    ref = jnp.tanh(h2 @ params["w3"] + params["b3"])
    assert out.shape == (batch, output_shape)
    err = float(jnp.max(jnp.abs(out.astype(jnp.float32) - ref)))
    assert jnp.allclose(out.astype(jnp.float32), ref, atol=3e-2, rtol=3e-2), err

    print("KERNEL_OK")
</pallas_src>

<mosaic_0001>
module attributes {stable_mosaic.version = 11 : i64} {
  func.func @actor_kernel(%arg0: i32, %arg1: memref<16x16xf32, #tpu.memory_space<vmem>>, %arg2: memref<16x128xbf16, #tpu.memory_space<vmem>>, %arg3: memref<1x128xf32, #tpu.memory_space<vmem>>, %arg4: memref<128x128xbf16, #tpu.memory_space<vmem>>, %arg5: memref<1x128xf32, #tpu.memory_space<vmem>>, %arg6: memref<128x128xbf16, #tpu.memory_space<vmem>>, %arg7: memref<1x128xf32, #tpu.memory_space<vmem>>, %arg8: memref<16x128xf32, #tpu.memory_space<vmem>>) attributes {dimension_semantics = [#tpu.dimension_semantics<parallel>], iteration_bounds = array<i64: 1>, scalar_prefetch = 0 : i64, scratch_operands = 0 : i64, tpu.core_type = #tpu.core_type<tc>, window_params = [{transform_indices = @transform_0, window_bounds = array<i64: 16, 16>}, {pipeline_mode = #tpu.pipeline_mode<synchronous>, transform_indices = @transform_1, window_bounds = array<i64: 16, 128>}, {pipeline_mode = #tpu.pipeline_mode<synchronous>, transform_indices = @transform_2, window_bounds = array<i64: 1, 128>}, {pipeline_mode = #tpu.pipeline_mode<synchronous>, transform_indices = @transform_3, window_bounds = array<i64: 128, 128>}, {pipeline_mode = #tpu.pipeline_mode<synchronous>, transform_indices = @transform_4, window_bounds = array<i64: 1, 128>}, {pipeline_mode = #tpu.pipeline_mode<synchronous>, transform_indices = @transform_5, window_bounds = array<i64: 128, 128>}, {pipeline_mode = #tpu.pipeline_mode<synchronous>, transform_indices = @transform_6, window_bounds = array<i64: 1, 128>}, {transform_indices = @transform_7, window_bounds = array<i64: 16, 128>}]} {
    %c0 = arith.constant 0 : index
    %c0_0 = arith.constant 0 : index
    %0 = vector.load %arg1[%c0, %c0_0] : memref<16x16xf32, #tpu.memory_space<vmem>>, vector<16x16xf32>
    %1 = arith.truncf %0 : vector<16x16xf32> to vector<16x16xbf16>
    %c0_1 = arith.constant 0 : index
    %c0_2 = arith.constant 0 : index
    %2 = vector.load %arg2[%c0_1, %c0_2] : memref<16x128xbf16, #tpu.memory_space<vmem>>, vector<16x128xbf16>
    %cst = arith.constant dense<0.000000e+00> : vector<16x128xf32>
    %3 = tpu.matmul %1, %2, %cst {dimension_numbers = #tpu.dot_dimension_numbers<[1], [0], [0], [1], [0, 0, 1, 1], [], []>} : vector<16x16xbf16>, vector<16x128xbf16>, vector<16x128xf32> -> vector<16x128xf32>
    %c0_3 = arith.constant 0 : index
    %c0_4 = arith.constant 0 : index
    %4 = vector.load %arg3[%c0_3, %c0_4] : memref<1x128xf32, #tpu.memory_space<vmem>>, vector<1x128xf32>
    %5 = vector.broadcast %4 : vector<1x128xf32> to vector<16x128xf32>
    %6 = arith.addf %3, %5 : vector<16x128xf32>
    %cst_5 = arith.constant 0.000000e+00 : f32
    %7 = vector.broadcast %cst_5 : f32 to vector<16x128xf32>
    %8 = arith.maximumf %6, %7 : vector<16x128xf32>
    %9 = arith.truncf %8 : vector<16x128xf32> to vector<16x128xbf16>
    %c0_6 = arith.constant 0 : index
    %c0_7 = arith.constant 0 : index
    %10 = vector.load %arg4[%c0_6, %c0_7] : memref<128x128xbf16, #tpu.memory_space<vmem>>, vector<128x128xbf16>
    %cst_8 = arith.constant dense<0.000000e+00> : vector<16x128xf32>
    %11 = tpu.matmul %9, %10, %cst_8 {dimension_numbers = #tpu.dot_dimension_numbers<[1], [0], [0], [1], [0, 0, 1, 1], [], []>} : vector<16x128xbf16>, vector<128x128xbf16>, vector<16x128xf32> -> vector<16x128xf32>
    %c0_9 = arith.constant 0 : index
    %c0_10 = arith.constant 0 : index
    %12 = vector.load %arg5[%c0_9, %c0_10] : memref<1x128xf32, #tpu.memory_space<vmem>>, vector<1x128xf32>
    %13 = vector.broadcast %12 : vector<1x128xf32> to vector<16x128xf32>
    %14 = arith.addf %11, %13 : vector<16x128xf32>
    %cst_11 = arith.constant 0.000000e+00 : f32
    %15 = vector.broadcast %cst_11 : f32 to vector<16x128xf32>
    %16 = arith.maximumf %14, %15 : vector<16x128xf32>
    %17 = arith.truncf %16 : vector<16x128xf32> to vector<16x128xbf16>
    %c0_12 = arith.constant 0 : index
    %c0_13 = arith.constant 0 : index
    %18 = vector.load %arg6[%c0_12, %c0_13] : memref<128x128xbf16, #tpu.memory_space<vmem>>, vector<128x128xbf16>
    %cst_14 = arith.constant dense<0.000000e+00> : vector<16x128xf32>
    %19 = tpu.matmul %17, %18, %cst_14 {dimension_numbers = #tpu.dot_dimension_numbers<[1], [0], [0], [1], [0, 0, 1, 1], [], []>} : vector<16x128xbf16>, vector<128x128xbf16>, vector<16x128xf32> -> vector<16x128xf32>
    %c0_15 = arith.constant 0 : index
    %c0_16 = arith.constant 0 : index
    %20 = vector.load %arg7[%c0_15, %c0_16] : memref<1x128xf32, #tpu.memory_space<vmem>>, vector<1x128xf32>
    %21 = vector.broadcast %20 : vector<1x128xf32> to vector<16x128xf32>
    %22 = arith.addf %19, %21 : vector<16x128xf32>
    %23 = math.tanh %22 : vector<16x128xf32>
    %c0_17 = arith.constant 0 : index
    %c0_18 = arith.constant 0 : index
    %24 = vector.load %arg8[%c0_17, %c0_18] : memref<16x128xf32, #tpu.memory_space<vmem>>, vector<16x128xf32>
    tpu.vector_store %arg8[%c0_17, %c0_18], %23 {strides = array<i32>} : memref<16x128xf32, #tpu.memory_space<vmem>>, vector<16x128xf32>,
    return
  }
  func.func @transform_0(%arg0: i32) -> (i32, i32) {
    %c0_i32 = arith.constant 0 : i32
    %c0_i32_0 = arith.constant 0 : i32
    return %arg0, %c0_i32 : i32, i32
  }
  func.func @transform_1(%arg0: i32) -> (i32, i32) {
    %c0_i32 = arith.constant 0 : i32
    %c0_i32_0 = arith.constant 0 : i32
    %c0_i32_1 = arith.constant 0 : i32
    return %c0_i32, %c0_i32_0 : i32, i32
  }
  func.func @transform_2(%arg0: i32) -> (i32, i32) {
    %c0_i32 = arith.constant 0 : i32
    %c0_i32_0 = arith.constant 0 : i32
    %c0_i32_1 = arith.constant 0 : i32
    return %c0_i32, %c0_i32_0 : i32, i32
  }
  func.func @transform_3(%arg0: i32) -> (i32, i32) {
    %c0_i32 = arith.constant 0 : i32
    %c0_i32_0 = arith.constant 0 : i32
    %c0_i32_1 = arith.constant 0 : i32
    return %c0_i32, %c0_i32_0 : i32, i32
  }
  func.func @transform_4(%arg0: i32) -> (i32, i32) {
    %c0_i32 = arith.constant 0 : i32
    %c0_i32_0 = arith.constant 0 : i32
    %c0_i32_1 = arith.constant 0 : i32
    return %c0_i32, %c0_i32_0 : i32, i32
  }
  func.func @transform_5(%arg0: i32) -> (i32, i32) {
    %c0_i32 = arith.constant 0 : i32
    %c0_i32_0 = arith.constant 0 : i32
    %c0_i32_1 = arith.constant 0 : i32
    return %c0_i32, %c0_i32_0 : i32, i32
  }
  func.func @transform_6(%arg0: i32) -> (i32, i32) {
    %c0_i32 = arith.constant 0 : i32
    %c0_i32_0 = arith.constant 0 : i32
    %c0_i32_1 = arith.constant 0 : i32
    return %c0_i32, %c0_i32_0 : i32, i32
  }
  func.func @transform_7(%arg0: i32) -> (i32, i32) {
    %c0_i32 = arith.constant 0 : i32
    %c0_i32_0 = arith.constant 0 : i32
    return %arg0, %c0_i32 : i32, i32
  }
}

</mosaic_0001>

<llo_original>
// kernel: actor_forward.1
$region0: #{actor_forward.1}
  #allocation0 [shape = 'u32[]', space=smem, size = 0x4, offset = 0x4, fixed_abs, tag = 'smem constant byte address 0x4 - core index']
  #allocation1 [shape = 'u32[144,128]{1,0:T(1,128)}', space=vmem, size = 0x12000, scoped, tag = 'internal scratch']
  %s0 = inlined_call_operand.vmem [shape: f32[16,16], index: 0, kind: input, shape index: {}]
  %s1 = inlined_call_operand.vmem [shape: bf16[16,128], index: 1, kind: input, shape index: {}]
  %s2 = inlined_call_operand.vmem [shape: f32[1,128], index: 2, kind: input, shape index: {}]
  %s3 = inlined_call_operand.hbm [shape: bf16[128,128], index: 3, kind: input, shape index: {}]
  %s4 = inlined_call_operand.vmem [shape: f32[1,128], index: 4, kind: input, shape index: {}]
  %s5 = inlined_call_operand.hbm [shape: bf16[128,128], index: 5, kind: input, shape index: {}]
  %s6 = inlined_call_operand.vmem [shape: f32[1,128], index: 6, kind: input, shape index: {}]
  %s7 = inlined_call_operand.vmem [shape: f32[16,128], index: 7, kind: output, shape index: {}]
  %s8 = sld [smem:[#allocation0]]
  $region46: #{actor_forward.1} parent=0
    _
  %s10 = ssub.s32 1, %s8
  %s11 = scalar_select 0, %s10, %s8
  $region1: #{actor_forward.1} parent=0
    #allocation2 [shape = 'u8[32768]{0}', space=vmem, size = 0x8000, scoped, tag = 'input window, operand 3, single buffered']
    #allocation3 [shape = 's32[1]{0}', space=sflag, size = 0x4, scoped, tag = 'scoped memory for actor_forward.1']
    #allocation4 [shape = 'u8[32768]{0}', space=vmem, size = 0x8000, scoped, tag = 'input window, operand 5, single buffered']
    #allocation5 [shape = 's32[1]{0}', space=sflag, size = 0x4, scoped, tag = 'scoped memory for actor_forward.1']
    %12 = vsyncpa [#allocation3], 0
    %13 = vsyncpa [#allocation5], 0
    // Predicated region
    $region2: #{actor_forward.1} parent=1 // pred_check
      _
    $region3: #{actor_forward.1} parent=1 // pred_check_branch
      %15 = sbr.rel (0) target = $region5
    $region4: #{actor_forward.1} parent=1 // pred_region
      _
    $region5: #{actor_forward.1} parent=1 // pred_fallthru
      _
    // Predicated region
    $region6: #{actor_forward.1} parent=1 // pred_check
      _
    $region7: #{actor_forward.1} parent=1 // pred_check_branch
      %17 = sbr.rel (0) target = $region9
    $region8: #{actor_forward.1} parent=1 // pred_region
      _
    $region9: #{actor_forward.1} parent=1 // pred_fallthru
      _
    // Predicated region
    $region10: #{actor_forward.1} parent=1 // pred_check
      _
    $region11: #{actor_forward.1} parent=1 // pred_check_branch
      %19 = sbr.rel (0) target = $region13
    $region12: #{actor_forward.1} parent=1 // pred_region
      _
    $region13: #{actor_forward.1} parent=1 // pred_fallthru
      _
    // Predicated region
    $region14: #{actor_forward.1} parent=1 // pred_check
      _
    $region15: #{actor_forward.1} parent=1 // pred_check_branch
      %21 = sbr.rel (0) target = $region17
    $region16: #{actor_forward.1} parent=1 // pred_region
      %s23 = ssub.s32 1024, 1024
      %24 = vsyncadd [#allocation3], %s23
      %s25 = sshll.u32 [#allocation2], 4
      %s26 = int_to_ptr.vmem [resolvable:$true] %s25
      %31 = dma.hbm_to_vmem [thread:$0]  %s3, 1024, %s26, [#allocation3], 64, 64, 4
    $region17: #{actor_forward.1} parent=1 // pred_fallthru
      _
    // Predicated region
    $region18: #{actor_forward.1} parent=1 // pred_check
      _
    $region19: #{actor_forward.1} parent=1 // pred_check_branch
      %33 = sbr.rel (0) target = $region21
    $region20: #{actor_forward.1} parent=1 // pred_region
      _
    $region21: #{actor_forward.1} parent=1 // pred_fallthru
      _
    // Predicated region
    $region22: #{actor_forward.1} parent=1 // pred_check
      _
    $region23: #{actor_forward.1} parent=1 // pred_check_branch
      %35 = sbr.rel (0) target = $region25
    $region24: #{actor_forward.1} parent=1 // pred_region
      %s37 = ssub.s32 1024, 1024
      %38 = vsyncadd [#allocation5], %s37
      %s39 = sshll.u32 [#allocation4], 4
      %s40 = int_to_ptr.vmem [resolvable:$true] %s39
      %45 = dma.hbm_to_vmem [thread:$0]  %s5, 1024, %s40, [#allocation5], 64, 64, 4
    $region25: #{actor_forward.1} parent=1 // pred_fallthru
      _
    // Predicated region
    $region26: #{actor_forward.1} parent=1 // pred_check
      _
    $region27: #{actor_forward.1} parent=1 // pred_check_branch
      %47 = sbr.rel (0) target = $region29
    $region28: #{actor_forward.1} parent=1 // pred_region
      _
    $region29: #{actor_forward.1} parent=1 // pred_fallthru
      _
    // Predicated region
    $region30: #{actor_forward.1} parent=1 // pred_check
      _
    $region31: #{actor_forward.1} parent=1 // pred_check_branch
      %49 = sbr.rel (0) target = $region33
    $region32: #{actor_forward.1} parent=1 // pred_region
      %50 = dma.done [#allocation3], 1024
    $region33: #{actor_forward.1} parent=1 // pred_fallthru
      _
    // Predicated region
    $region34: #{actor_forward.1} parent=1 // pred_check
      _
    $region35: #{actor_forward.1} parent=1 // pred_check_branch
      %52 = sbr.rel (0) target = $region37
    $region36: #{actor_forward.1} parent=1 // pred_region
      %53 = dma.done [#allocation5], 1024
    $region37: #{actor_forward.1} parent=1 // pred_fallthru
      _
    %v55 = vld [vmem:[%s0] sm:$0xff]
    %v56 = vld [vmem:[%s0 + $0x8] sm:$0xff]
    %v57 = vpack.c.bf16 %v56, %v55
    %v58 = vld [vmem:[%s1] sm:$0xf]
    %v59 = vld [vmem:[%s1 + $0x4] sm:$0xf]
    %v60 = vld [vmem:[%s2] sm:$0x1]
    %v62 = vlaneseq
    %v63 = vshrl.u32 %v62, 7
    %v64 = vsub.s32 0, %v63
    %v65 = vrot.slane %v60, %v64
    %v69 = vunpack.c.l.b16 %v58
    %v70 = vunpack.c.l.b16 %v59
    %v71 = vpack.c.b16 %v70, %v69
    %vm73 = vcmask 130048
    %v75 = vsel %vm73, %v57, 0
    %77 = vmatprep.subr.bf16.mxu0 0
    %78 = vmatpush1.bf16.msra.mxu0 0
    %79 = vmatprep.subr.bf16.mxu0 0
    %80 = vmatpush1.bf16.msra.mxu0 0
    %81 = vmatprep.subr.bf16.mxu0 0
    %82 = vmatpush1.bf16.msra.mxu0 0
    %83 = vmatprep.subr.bf16.mxu0 0
    %84 = vmatpush1.bf16.msra.mxu0 0
    %85 = vmatprep.subr.bf16.mxu0 0
    %86 = vmatpush1.bf16.msra.mxu0 0
    %87 = vmatprep.subr.bf16.mxu0 0
    %88 = vmatpush1.bf16.msra.mxu0 0
    %89 = vmatprep.subr.bf16.mxu0 0
    %90 = vmatpush1.bf16.msra.mxu0 0
    %91 = vmatprep.subr.bf16.mxu0 0
    %92 = vmatpush1.bf16.msra.mxu0 %v71
    %93 = vmatprep.subr.bf16.mxu0 0
    %94 = vmatpush2.bf16.msra.mxu0 0
    %95 = vmatprep.subr.bf16.mxu0 0
    %96 = vmatpush2.bf16.msra.mxu0 0
    %97 = vmatprep.subr.bf16.mxu0 0
    %98 = vmatpush2.bf16.msra.mxu0 0
    %99 = vmatprep.subr.bf16.mxu0 0
    %100 = vmatpush2.bf16.msra.mxu0 0
    %101 = vmatprep.subr.bf16.mxu0 0
    %102 = vmatpush2.bf16.msra.mxu0 0
    %103 = vmatprep.subr.bf16.mxu0 0
    %104 = vmatpush2.bf16.msra.mxu0 0
    %105 = vmatprep.subr.bf16.mxu0 0
    %106 = vmatpush2.bf16.msra.mxu0 0
    %107 = vmatprep.subr.bf16.mxu0 0
    %108 = vmatpush2.bf16.msra.mxu0 0
    %109 = vmatprep.mubr.bf16.mxu0 0
    %110 = vmatmul.mubr.bf16.gmra.mxu0 %v75
    %v111 = vpop.f32.mrf.mxu0
    %v112 = vadd.f32 %v65, %v111
    %v113 = vpop.f32.mrf.mxu0
    %v114 = vpop.f32.mrf.mxu0
    %v115 = vadd.f32 %v65, %v114
    %v116 = vpop.f32.mrf.mxu0
    %117 = vdwg.mxu0
    %v118 = vmax.f32 %v112, 0.0
    %v119 = vmax.f32 %v115, 0.0
    %v120 = vpack.c.bf16 %v119, %v118
    %v121 = vld [vmem:[#allocation2] sm:$0xf]
    %v122 = vld [vmem:[#allocation2 + $0x4] sm:$0xf]
    %v123 = vld [vmem:[#allocation2 + $0x8] sm:$0xf]
    %v124 = vld [vmem:[#allocation2 + $0xc] sm:$0xf]
    %v125 = vld [vmem:[#allocation2 + $0x10] sm:$0xf]
    %v126 = vld [vmem:[#allocation2 + $0x14] sm:$0xf]
    %v127 = vld [vmem:[#allocation2 + $0x18] sm:$0xf]
    %v128 = vld [vmem:[#allocation2 + $0x1c] sm:$0xf]
    %v129 = vld [vmem:[#allocation2 + $0x20] sm:$0xf]
    %v130 = vld [vmem:[#allocation2 + $0x24] sm:$0xf]
    %v131 = vld [vmem:[#allocation2 + $0x28] sm:$0xf]
    %v132 = vld [vmem:[#allocation2 + $0x2c] sm:$0xf]
    %v133 = vld [vmem:[#allocation2 + $0x30] sm:$0xf]
    %v134 = vld [vmem:[#allocation2 + $0x34] sm:$0xf]
    %v135 = vld [vmem:[#allocation2 + $0x38] sm:$0xf]
    %v136 = vld [vmem:[#allocation2 + $0x3c] sm:$0xf]
    %v137 = vld [vmem:[%s4] sm:$0x1]
    %v139 = vlaneseq
    %v140 = vshrl.u32 %v139, 7
    %v141 = vsub.s32 0, %v140
    %v142 = vrot.slane %v137, %v141
    %v160 = vunpack.c.l.b16 %v121
    %v161 = vunpack.c.l.b16 %v122
    %v162 = vunpack.c.l.b16 %v123
    %v163 = vunpack.c.l.b16 %v124
    %v164 = vunpack.c.l.b16 %v125
    %v165 = vunpack.c.l.b16 %v126
    %v166 = vunpack.c.l.b16 %v127
    %v167 = vunpack.c.l.b16 %v128
    %v168 = vunpack.c.l.b16 %v129
    %v169 = vunpack.c.l.b16 %v130
    %v170 = vunpack.c.l.b16 %v131
    %v171 = vunpack.c.l.b16 %v132
    %v172 = vunpack.c.l.b16 %v133
    %v173 = vunpack.c.l.b16 %v134
    %v174 = vunpack.c.l.b16 %v135
    %v175 = vunpack.c.l.b16 %v136
    %v176 = vpack.c.b16 %v161, %v160
    %v177 = vpack.c.b16 %v163, %v162
    %v178 = vpack.c.b16 %v165, %v164
    %v179 = vpack.c.b16 %v167, %v166
    %v180 = vpack.c.b16 %v169, %v168
    %v181 = vpack.c.b16 %v171, %v170
    %v182 = vpack.c.b16 %v173, %v172
    %v183 = vpack.c.b16 %v175, %v174
    %192 = vmatprep.subr.bf16.mxu0 0
    %193 = vmatpush1.bf16.msra.mxu0 %v183
    %194 = vmatprep.subr.bf16.mxu0 0
    %195 = vmatpush1.bf16.msra.mxu0 %v182
    %196 = vmatprep.subr.bf16.mxu0 0
    %197 = vmatpush1.bf16.msra.mxu0 %v181
    %198 = vmatprep.subr.bf16.mxu0 0
    %199 = vmatpush1.bf16.msra.mxu0 %v180
    %200 = vmatprep.subr.bf16.mxu0 0
    %201 = vmatpush1.bf16.msra.mxu0 %v179
    %202 = vmatprep.subr.bf16.mxu0 0
    %203 = vmatpush1.bf16.msra.mxu0 %v178
    %204 = vmatprep.subr.bf16.mxu0 0
    %205 = vmatpush1.bf16.msra.mxu0 %v177
    %206 = vmatprep.subr.bf16.mxu0 0
    %207 = vmatpush1.bf16.msra.mxu0 %v176
    %208 = vmatprep.subr.bf16.mxu0 0
    %209 = vmatpush2.bf16.msra.mxu0 0
    %210 = vmatprep.subr.bf16.mxu0 0
    %211 = vmatpush2.bf16.msra.mxu0 0
    %212 = vmatprep.subr.bf16.mxu0 0
    %213 = vmatpush2.bf16.msra.mxu0 0
    %214 = vmatprep.subr.bf16.mxu0 0
    %215 = vmatpush2.bf16.msra.mxu0 0
    %216 = vmatprep.subr.bf16.mxu0 0
    %217 = vmatpush2.bf16.msra.mxu0 0
    %218 = vmatprep.subr.bf16.mxu0 0
    %219 = vmatpush2.bf16.msra.mxu0 0
    %220 = vmatprep.subr.bf16.mxu0 0
    %221 = vmatpush2.bf16.msra.mxu0 0
    %222 = vmatprep.subr.bf16.mxu0 0
    %223 = vmatpush2.bf16.msra.mxu0 0
    %224 = vmatprep.mubr.bf16.mxu0 0
    %225 = vmatmul.mubr.bf16.gmra.mxu0 %v120
    %v226 = vpop.f32.mrf.mxu0
    %v227 = vadd.f32 %v142, %v226
    %v228 = vpop.f32.mrf.mxu0
    %v229 = vpop.f32.mrf.mxu0
    %v230 = vadd.f32 %v142, %v229
    %v231 = vpop.f32.mrf.mxu0
    %232 = vdwg.mxu0
    %v233 = vmax.f32 %v227, 0.0
    %v234 = vmax.f32 %v230, 0.0
    %v235 = vpack.c.bf16 %v234, %v233
    %v236 = vld [vmem:[#allocation4] sm:$0xf]
    %v237 = vld [vmem:[#allocation4 + $0x4] sm:$0xf]
    %v238 = vld [vmem:[#allocation4 + $0x8] sm:$0xf]
    %v239 = vld [vmem:[#allocation4 + $0xc] sm:$0xf]
    %v240 = vld [vmem:[#allocation4 + $0x10] sm:$0xf]
    %v241 = vld [vmem:[#allocation4 + $0x14] sm:$0xf]
    %v242 = vld [vmem:[#allocation4 + $0x18] sm:$0xf]
    %v243 = vld [vmem:[#allocation4 + $0x1c] sm:$0xf]
    %v244 = vld [vmem:[#allocation4 + $0x20] sm:$0xf]
    %v245 = vld [vmem:[#allocation4 + $0x24] sm:$0xf]
    %v246 = vld [vmem:[#allocation4 + $0x28] sm:$0xf]
    %v247 = vld [vmem:[#allocation4 + $0x2c] sm:$0xf]
    %v248 = vld [vmem:[#allocation4 + $0x30] sm:$0xf]
    %v249 = vld [vmem:[#allocation4 + $0x34] sm:$0xf]
    %v250 = vld [vmem:[#allocation4 + $0x38] sm:$0xf]
    %v251 = vld [vmem:[#allocation4 + $0x3c] sm:$0xf]
    %v252 = vld [vmem:[%s6] sm:$0x1]
    %v254 = vlaneseq
    %v255 = vshrl.u32 %v254, 7
    %v256 = vsub.s32 0, %v255
    %v257 = vrot.slane %v252, %v256
    %v275 = vunpack.c.l.b16 %v236
    %v276 = vunpack.c.l.b16 %v237
    %v277 = vunpack.c.l.b16 %v238
    %v278 = vunpack.c.l.b16 %v239
    %v279 = vunpack.c.l.b16 %v240
    %v280 = vunpack.c.l.b16 %v241
    %v281 = vunpack.c.l.b16 %v242
    %v282 = vunpack.c.l.b16 %v243
    %v283 = vunpack.c.l.b16 %v244
    %v284 = vunpack.c.l.b16 %v245
    %v285 = vunpack.c.l.b16 %v246
    %v286 = vunpack.c.l.b16 %v247
    %v287 = vunpack.c.l.b16 %v248
    %v288 = vunpack.c.l.b16 %v249
    %v289 = vunpack.c.l.b16 %v250
    %v290 = vunpack.c.l.b16 %v251
    %v291 = vpack.c.b16 %v276, %v275
    %v292 = vpack.c.b16 %v278, %v277
    %v293 = vpack.c.b16 %v280, %v279
    %v294 = vpack.c.b16 %v282, %v281
    %v295 = vpack.c.b16 %v284, %v283
    %v296 = vpack.c.b16 %v286, %v285
    %v297 = vpack.c.b16 %v288, %v287
    %v298 = vpack.c.b16 %v290, %v289
    %307 = vmatprep.subr.bf16.mxu0 0
    %308 = vmatpush1.bf16.msra.mxu0 %v298
    %309 = vmatprep.subr.bf16.mxu0 0
    %310 = vmatpush1.bf16.msra.mxu0 %v297
    %311 = vmatprep.subr.bf16.mxu0 0
    %312 = vmatpush1.bf16.msra.mxu0 %v296
    %313 = vmatprep.subr.bf16.mxu0 0
    %314 = vmatpush1.bf16.msra.mxu0 %v295
    %315 = vmatprep.subr.bf16.mxu0 0
    %316 = vmatpush1.bf16.msra.mxu0 %v294
    %317 = vmatprep.subr.bf16.mxu0 0
    %318 = vmatpush1.bf16.msra.mxu0 %v293
    %319 = vmatprep.subr.bf16.mxu0 0
    %320 = vmatpush1.bf16.msra.mxu0 %v292
    %321 = vmatprep.subr.bf16.mxu0 0
    %322 = vmatpush1.bf16.msra.mxu0 %v291
    %323 = vmatprep.subr.bf16.mxu0 0
    %324 = vmatpush2.bf16.msra.mxu0 0
    %325 = vmatprep.subr.bf16.mxu0 0
    %326 = vmatpush2.bf16.msra.mxu0 0
    %327 = vmatprep.subr.bf16.mxu0 0
    %328 = vmatpush2.bf16.msra.mxu0 0
    %329 = vmatprep.subr.bf16.mxu0 0
    %330 = vmatpush2.bf16.msra.mxu0 0
    %331 = vmatprep.subr.bf16.mxu0 0
    %332 = vmatpush2.bf16.msra.mxu0 0
    %333 = vmatprep.subr.bf16.mxu0 0
    %334 = vmatpush2.bf16.msra.mxu0 0
    %335 = vmatprep.subr.bf16.mxu0 0
    %336 = vmatpush2.bf16.msra.mxu0 0
    %337 = vmatprep.subr.bf16.mxu0 0
    %338 = vmatpush2.bf16.msra.mxu0 0
    %339 = vmatprep.mubr.bf16.mxu0 0
    %340 = vmatmul.mubr.bf16.gmra.mxu0 %v235
    %v341 = vpop.f32.mrf.mxu0
    %v342 = vadd.f32 %v257, %v341
    %v343 = vpop.f32.mrf.mxu0
    %v344 = vpop.f32.mrf.mxu0
    %v345 = vadd.f32 %v257, %v344
    %v346 = vpop.f32.mrf.mxu0
    %347 = vdwg.mxu0
    %v348 = vtanh.pop %v342
    %v349 = vtanh.pop %v345
    %350 = vst [vmem:[%s7] sm:$0xff] %v348
    %351 = vst [vmem:[%s7 + $0x8] sm:$0xff] %v349
    // Predicated region
    $region38: #{actor_forward.1} parent=1 // pred_check
      _
    $region39: #{actor_forward.1} parent=1 // pred_check_branch
      %353 = sbr.rel (0) target = $region41
    $region40: #{actor_forward.1} parent=1 // pred_region
      _
    $region41: #{actor_forward.1} parent=1 // pred_fallthru
      _
    // Predicated region
    $region42: #{actor_forward.1} parent=1 // pred_check
      _
    $region43: #{actor_forward.1} parent=1 // pred_check_branch
      %355 = sbr.rel (0) target = $region45
    $region44: #{actor_forward.1} parent=1 // pred_region
      _
    $region45: #{actor_forward.1} parent=1 // pred_fallthru
      _
    %356 = vsyncpa [#allocation3], 1
    %357 = vsyncpa [#allocation5], 1

</llo_original>
